<compile_context>
chip_gen: v6e
topology: v6e:2x2x1
jax: 0.10.0
libtpu: 0.0.40
codegen_flags: <defaults>
</compile_context>

<pallas_src>
import jax
import jax.numpy as jnp
from jax.experimental import pallas as pl
from jax.experimental.pallas import tpu as pltpu

FEAT = 256
OUT = 10


def ggl_kernel(x_ref, w_ref, b_ref, anorm_ref):
    """Linear + Sigmoid + Gram matrix + column-max normalization (all in VMEM)."""
    x = x_ref[...]                      # (N, 256) f32
    w = w_ref[...]                      # (256, 10) f32
    b = b_ref[...]                      # (1, 10)  f32

    # atrr = sigmoid(x @ W + b)   -> (N, 10)
    logits = jnp.dot(x, w, preferred_element_type=jnp.float32) + b
    atrr = jax.nn.sigmoid(logits)       # lax.logistic -> single EUP transcendental

    # A = atrr @ atrr.T  -> (N, N); contract last dim of both (no explicit transpose).
    a_mat = jax.lax.dot_general(
        atrr, atrr,
        dimension_numbers=(((1,), (1,)), ((), ())),
        preferred_element_type=jnp.float32,
    )

    # torch: maxval = A.max(axis=1);  A_norm = A / maxval  (broadcast over columns,
    # i.e. A[i, j] / maxval[j]).  A is symmetric, so column-max == row-max and the
    # axis=0 reduction directly yields the lane-aligned (1, N) layout we need.
    maxv = jnp.max(a_mat, axis=0, keepdims=True)           # (1, N)
    inv_maxv = pl.reciprocal(maxv)                          # exact; one recip per column
    anorm_ref[...] = a_mat * inv_maxv


def ggl_forward(x, w, b):
    """Full GGL.forward. Returns (values_flat, edge_index) like the PyTorch module."""
    n = x.shape[0]
    x_flat = x.reshape(n, -1).astype(jnp.float32)           # (N, 256)
    assert x_flat.shape[1] == FEAT, "GGL expects 256 flattened features per sample"
    b2 = b.reshape(1, OUT).astype(jnp.float32)

    a_norm = pl.pallas_call(
        ggl_kernel,
        out_shape=jax.ShapeDtypeStruct((n, n), jnp.float32),
        in_specs=[
            pl.BlockSpec(memory_space=pltpu.MemorySpace.VMEM),
            pl.BlockSpec(memory_space=pltpu.MemorySpace.VMEM),
            pl.BlockSpec(memory_space=pltpu.MemorySpace.VMEM),
        ],
        out_specs=pl.BlockSpec(memory_space=pltpu.MemorySpace.VMEM),
    )(x_flat, w.astype(jnp.float32), b2)

    # topk with k == N and sorted=False: every element of each row is returned and the
    # order is unspecified, so the identity permutation is a valid realization.
    # values == A_norm flattened row-major; indices[i] == [0..N-1].
    values = a_norm.reshape(-1)

    # edge_index row 0: each source node i repeated N times; row 1: its (identity) indices.
    # TODO(synk): torch returns int64 edge_index; int32 used here (JAX default, no x64).
    src = jnp.repeat(jnp.arange(n, dtype=jnp.int32), n)
    dst = jnp.tile(jnp.arange(n, dtype=jnp.int32), n)
    edge_index = jnp.stack([src, dst], axis=0)

    return values, edge_index


if __name__ == "__main__":
    key = jax.random.PRNGKey(0)
    kx, kw, kb = jax.random.split(key, 3)

    # N=8 samples, NCHW with C*H*W = 4*8*8 = 256 (matches Linear(256, 10)).
    x = jax.random.normal(kx, (8, 4, 8, 8), dtype=jnp.float32)

    # Deterministic Linear(256, 10) params (PyTorch-style uniform(-1/sqrt(in), 1/sqrt(in))).
    bound = 1.0 / (FEAT ** 0.5)
    w = jax.random.uniform(kw, (FEAT, OUT), minval=-bound, maxval=bound, dtype=jnp.float32)
    b = jax.random.uniform(kb, (OUT,), minval=-bound, maxval=bound, dtype=jnp.float32)

    values, edge_index = ggl_forward(x, w, b)
    jax.block_until_ready((values, edge_index))

    assert values.shape == (8 * 8,)
    assert edge_index.shape == (2, 8 * 8)
    assert bool(jnp.all(jnp.isfinite(values)))
    print("KERNEL_OK")
</pallas_src>

<mosaic_0001>
module attributes {stable_mosaic.version = 11 : i64} {
  func.func @ggl_kernel(%arg0: memref<8x256xf32, #tpu.memory_space<vmem>>, %arg1: memref<256x10xf32, #tpu.memory_space<vmem>>, %arg2: memref<1x10xf32, #tpu.memory_space<vmem>>, %arg3: memref<8x8xf32, #tpu.memory_space<vmem>>) attributes {dimension_semantics = [], scalar_prefetch = 0 : i64, scratch_operands = 0 : i64, tpu.core_type = #tpu.core_type<tc>} {
    %c0 = arith.constant 0 : index
    %c0_0 = arith.constant 0 : index
    %0 = vector.load %arg0[%c0, %c0_0] : memref<8x256xf32, #tpu.memory_space<vmem>>, vector<8x256xf32>
    %c0_1 = arith.constant 0 : index
    %c0_2 = arith.constant 0 : index
    %1 = vector.load %arg1[%c0_1, %c0_2] : memref<256x10xf32, #tpu.memory_space<vmem>>, vector<256x10xf32>
    %c0_3 = arith.constant 0 : index
    %c0_4 = arith.constant 0 : index
    %2 = vector.load %arg2[%c0_3, %c0_4] : memref<1x10xf32, #tpu.memory_space<vmem>>, vector<1x10xf32>
    %cst = arith.constant dense<0.000000e+00> : vector<8x10xf32>
    %3 = tpu.matmul %0, %1, %cst {dimension_numbers = #tpu.dot_dimension_numbers<[1], [0], [0], [1], [0, 0, 1, 1], [], []>} : vector<8x256xf32>, vector<256x10xf32>, vector<8x10xf32> -> vector<8x10xf32>
    %4 = vector.broadcast %2 : vector<1x10xf32> to vector<8x10xf32>
    %5 = arith.addf %3, %4 : vector<8x10xf32>
    %6 = arith.negf %5 : vector<8x10xf32>
    %7 = math.exp %6 : vector<8x10xf32>
    %cst_5 = arith.constant 1.000000e+00 : f32
    %8 = vector.broadcast %cst_5 : f32 to vector<8x10xf32>
    %9 = arith.addf %8, %7 : vector<8x10xf32>
    %10 = arith.divf %8, %9 : vector<8x10xf32>
    %cst_6 = arith.constant dense<0.000000e+00> : vector<8x8xf32>
    %11 = tpu.matmul %10, %10, %cst_6 {dimension_numbers = #tpu.dot_dimension_numbers<[1], [1], [0], [0], [0, 0, 1, 0], [], []>} : vector<8x10xf32>, vector<8x10xf32>, vector<8x8xf32> -> vector<8x8xf32>
    %cst_7 = arith.constant dense<0xFF800000> : vector<8xf32>
    %12 = vector.multi_reduction <maximumf>, %11, %cst_7 [0] : vector<8x8xf32> to vector<8xf32>
    %13 = vector.shape_cast %12 : vector<8xf32> to vector<1x8xf32>
    %14 = tpu.reciprocal %13 : vector<1x8xf32> -> vector<1x8xf32>
    %15 = vector.broadcast %14 : vector<1x8xf32> to vector<8x8xf32>
    %16 = arith.mulf %11, %15 : vector<8x8xf32>
    %c0_8 = arith.constant 0 : index
    %c0_9 = arith.constant 0 : index
    %17 = vector.load %arg3[%c0_8, %c0_9] : memref<8x8xf32, #tpu.memory_space<vmem>>, vector<8x8xf32>
    tpu.vector_store %arg3[%c0_8, %c0_9], %16 {strides = array<i32>} : memref<8x8xf32, #tpu.memory_space<vmem>>, vector<8x8xf32>,
    return
  }
}

</mosaic_0001>

<llo_original>
// kernel: tpu_custom_call.1
$region0: #{tpu_custom_call.1}
  #allocation0 [shape = 'u32[]', space=smem, size = 0x4, offset = 0x4, fixed_abs, tag = 'smem constant byte address 0x4 - core index']
  #allocation1 [shape = 'u32[144,128]{1,0:T(1,128)}', space=vmem, size = 0x12000, scoped, tag = 'internal scratch']
  %s0 = inlined_call_operand.vmem [shape: f32[8,256], index: 0, kind: input, shape index: {}]
  %s1 = inlined_call_operand.vmem [shape: f32[256,10], index: 1, kind: input, shape index: {}]
  %s2 = inlined_call_operand.vmem [shape: f32[1,10], index: 2, kind: input, shape index: {}]
  %s3 = inlined_call_operand.hbm [shape: f32[8,8], index: 3, kind: output, shape index: {}]
  %s4 = sld [smem:[#allocation0]]
  $region22: #{tpu_custom_call.1} parent=0
    _
  %s6 = ssub.s32 1, %s4
  %s7 = scalar_select 0, %s6, %s4
  $region1: #{tpu_custom_call.1} parent=0
    #allocation2 [shape = 'u8[4096]{0}', space=vmem, size = 0x1000, scoped, tag = 'output window, operand 0, single buffered']
    #allocation3 [shape = 's32[1]{0}', space=sflag, size = 0x4, scoped, tag = 'scoped memory for tpu_custom_call.1']
    %8 = vsyncpa [#allocation3], 0
    // Predicated region
    $region2: #{tpu_custom_call.1} parent=1 // pred_check
      _
    $region3: #{tpu_custom_call.1} parent=1 // pred_check_branch
      %10 = sbr.rel (0) target = $region5
    $region4: #{tpu_custom_call.1} parent=1 // pred_region
      _
    $region5: #{tpu_custom_call.1} parent=1 // pred_fallthru
      _
    // Predicated region
    $region6: #{tpu_custom_call.1} parent=1 // pred_check
      _
    $region7: #{tpu_custom_call.1} parent=1 // pred_check_branch
      %12 = sbr.rel (0) target = $region9
    $region8: #{tpu_custom_call.1} parent=1 // pred_region
      _
    $region9: #{tpu_custom_call.1} parent=1 // pred_fallthru
      _
    // Predicated region
    $region10: #{tpu_custom_call.1} parent=1 // pred_check
      _
    $region11: #{tpu_custom_call.1} parent=1 // pred_check_branch
      %14 = sbr.rel (0) target = $region13
    $region12: #{tpu_custom_call.1} parent=1 // pred_region
      _
    $region13: #{tpu_custom_call.1} parent=1 // pred_fallthru
      _
    %v15 = vld [vmem:[%s0] sm:$0xff]
    %v16 = vld [vmem:[%s0 + $0x8] sm:$0xff]
    %v17 = vld [vmem:[%s1] sm:$0xff]
    %v18 = vld [vmem:[%s1 + $0x8] sm:$0xff]
    %v19 = vld [vmem:[%s1 + $0x10] sm:$0xff]
    %v20 = vld [vmem:[%s1 + $0x18] sm:$0xff]
    %v21 = vld [vmem:[%s1 + $0x20] sm:$0xff]
    %v22 = vld [vmem:[%s1 + $0x28] sm:$0xff]
    %v23 = vld [vmem:[%s1 + $0x30] sm:$0xff]
    %v24 = vld [vmem:[%s1 + $0x38] sm:$0xff]
    %v25 = vld [vmem:[%s1 + $0x40] sm:$0xff]
    %v26 = vld [vmem:[%s1 + $0x48] sm:$0xff]
    %v27 = vld [vmem:[%s1 + $0x50] sm:$0xff]
    %v28 = vld [vmem:[%s1 + $0x58] sm:$0xff]
    %v29 = vld [vmem:[%s1 + $0x60] sm:$0xff]
    %v30 = vld [vmem:[%s1 + $0x68] sm:$0xff]
    %v31 = vld [vmem:[%s1 + $0x70] sm:$0xff]
    %v32 = vld [vmem:[%s1 + $0x78] sm:$0xff]
    %v33 = vld [vmem:[%s1 + $0x80] sm:$0xff]
    %v34 = vld [vmem:[%s1 + $0x88] sm:$0xff]
    %v35 = vld [vmem:[%s1 + $0x90] sm:$0xff]
    %v36 = vld [vmem:[%s1 + $0x98] sm:$0xff]
    %v37 = vld [vmem:[%s1 + $0xa0] sm:$0xff]
    %v38 = vld [vmem:[%s1 + $0xa8] sm:$0xff]
    %v39 = vld [vmem:[%s1 + $0xb0] sm:$0xff]
    %v40 = vld [vmem:[%s1 + $0xb8] sm:$0xff]
    %v41 = vld [vmem:[%s1 + $0xc0] sm:$0xff]
    %v42 = vld [vmem:[%s1 + $0xc8] sm:$0xff]
    %v43 = vld [vmem:[%s1 + $0xd0] sm:$0xff]
    %v44 = vld [vmem:[%s1 + $0xd8] sm:$0xff]
    %v45 = vld [vmem:[%s1 + $0xe0] sm:$0xff]
    %v46 = vld [vmem:[%s1 + $0xe8] sm:$0xff]
    %v47 = vld [vmem:[%s1 + $0xf0] sm:$0xff]
    %v48 = vld [vmem:[%s1 + $0xf8] sm:$0xff]
    %v49 = vld [vmem:[%s2] sm:$0x1]
    %v51 = vlaneseq
    %v52 = vshrl.u32 %v51, 7
    %v53 = vsub.s32 0, %v52
    %v54 = vrot.slane %v49, %v53
    %56 = vmatprep.subr.mxu0 0.0
    %57 = vmatpush1.msra.mxu0 %v32
    %58 = vmatprep.subr.mxu0 0.0
    %59 = vmatpush1.msra.mxu0 %v31
    %60 = vmatprep.subr.mxu0 0.0
    %61 = vmatpush1.msra.mxu0 %v30
    %62 = vmatprep.subr.mxu0 0.0
    %63 = vmatpush1.msra.mxu0 %v29
    %64 = vmatprep.subr.mxu0 0.0
    %65 = vmatpush1.msra.mxu0 %v28
    %66 = vmatprep.subr.mxu0 0.0
    %67 = vmatpush1.msra.mxu0 %v27
    %68 = vmatprep.subr.mxu0 0.0
    %69 = vmatpush1.msra.mxu0 %v26
    %70 = vmatprep.subr.mxu0 0.0
    %71 = vmatpush1.msra.mxu0 %v25
    %72 = vmatprep.subr.mxu0 0.0
    %73 = vmatpush1.msra.mxu0 %v24
    %74 = vmatprep.subr.mxu0 0.0
    %75 = vmatpush1.msra.mxu0 %v23
    %76 = vmatprep.subr.mxu0 0.0
    %77 = vmatpush1.msra.mxu0 %v22
    %78 = vmatprep.subr.mxu0 0.0
    %79 = vmatpush1.msra.mxu0 %v21
    %80 = vmatprep.subr.mxu0 0.0
    %81 = vmatpush1.msra.mxu0 %v20
    %82 = vmatprep.subr.mxu0 0.0
    %83 = vmatpush1.msra.mxu0 %v19
    %84 = vmatprep.subr.mxu0 0.0
    %85 = vmatpush1.msra.mxu0 %v18
    %86 = vmatprep.subr.mxu0 0.0
    %87 = vmatpush1.msra.mxu0 %v17
    %88 = vmatprep.subr.mxu0 0.0
    %89 = vmatpush2.msra.mxu0 %v48
    %90 = vmatprep.subr.mxu0 0.0
    %91 = vmatpush2.msra.mxu0 %v47
    %92 = vmatprep.subr.mxu0 0.0
    %93 = vmatpush2.msra.mxu0 %v46
    %94 = vmatprep.subr.mxu0 0.0
    %95 = vmatpush2.msra.mxu0 %v45
    %96 = vmatprep.subr.mxu0 0.0
    %97 = vmatpush2.msra.mxu0 %v44
    %98 = vmatprep.subr.mxu0 0.0
    %99 = vmatpush2.msra.mxu0 %v43
    %100 = vmatprep.subr.mxu0 0.0
    %101 = vmatpush2.msra.mxu0 %v42
    %102 = vmatprep.subr.mxu0 0.0
    %103 = vmatpush2.msra.mxu0 %v41
    %104 = vmatprep.subr.mxu0 0.0
    %105 = vmatpush2.msra.mxu0 %v40
    %106 = vmatprep.subr.mxu0 0.0
    %107 = vmatpush2.msra.mxu0 %v39
    %108 = vmatprep.subr.mxu0 0.0
    %109 = vmatpush2.msra.mxu0 %v38
    %110 = vmatprep.subr.mxu0 0.0
    %111 = vmatpush2.msra.mxu0 %v37
    %112 = vmatprep.subr.mxu0 0.0
    %113 = vmatpush2.msra.mxu0 %v36
    %114 = vmatprep.subr.mxu0 0.0
    %115 = vmatpush2.msra.mxu0 %v35
    %116 = vmatprep.subr.mxu0 0.0
    %117 = vmatpush2.msra.mxu0 %v34
    %118 = vmatprep.subr.mxu0 0.0
    %119 = vmatpush2.msra.mxu0 %v33
    %120 = vmatprep.mubr.f32.mxu0 %v16
    %121 = vmatmul.mubr.f32.gmra.mxu0 %v15
    %v122 = vpop.f32.mrf.mxu0
    %v123 = vadd.f32 %v54, %v122
    %v124 = vpop.f32.mrf.mxu0
    %125 = vdwg.mxu0
    %v126 = vxor.u32 %v123, 2147483648
    %v127 = vmul.f32 %v126, 1.442695
    %v128 = vpow.pop %v127
    %v129 = vadd.f32 %v128, 1.0
    %v130 = vrcp.pop %v129
    %v131 = vmul.f32 1.0, %v130
    %vm132 = vcmask 80896
    %v134 = vsel %vm132, %v131, 0
    %136 = vmatprep.subr.mxu0 0.0
    %137 = vmatpush1.xpose.msra.mxu0 0.0
    %138 = vmatprep.subr.mxu0 0.0
    %139 = vmatpush1.xpose.msra.mxu0 0.0
    %140 = vmatprep.subr.mxu0 0.0
    %141 = vmatpush1.xpose.msra.mxu0 0.0
    %142 = vmatprep.subr.mxu0 0.0
    %143 = vmatpush1.xpose.msra.mxu0 0.0
    %144 = vmatprep.subr.mxu0 0.0
    %145 = vmatpush1.xpose.msra.mxu0 0.0
    %146 = vmatprep.subr.mxu0 0.0
    %147 = vmatpush1.xpose.msra.mxu0 0.0
    %148 = vmatprep.subr.mxu0 0.0
    %149 = vmatpush1.xpose.msra.mxu0 0.0
    %150 = vmatprep.subr.mxu0 0.0
    %151 = vmatpush1.xpose.msra.mxu0 0.0
    %152 = vmatprep.subr.mxu0 0.0
    %153 = vmatpush1.xpose.msra.mxu0 0.0
    %154 = vmatprep.subr.mxu0 0.0
    %155 = vmatpush1.xpose.msra.mxu0 0.0
    %156 = vmatprep.subr.mxu0 0.0
    %157 = vmatpush1.xpose.msra.mxu0 0.0
    %158 = vmatprep.subr.mxu0 0.0
    %159 = vmatpush1.xpose.msra.mxu0 0.0
    %160 = vmatprep.subr.mxu0 0.0
    %161 = vmatpush1.xpose.msra.mxu0 0.0
    %162 = vmatprep.subr.mxu0 0.0
    %163 = vmatpush1.xpose.msra.mxu0 0.0
    %164 = vmatprep.subr.mxu0 0.0
    %165 = vmatpush1.xpose.msra.mxu0 0.0
    %166 = vmatprep.subr.mxu0 0.0
    %167 = vmatpush1.xpose.msra.mxu0 %v134
    %168 = vmatprep.subr.mxu0 0.0
    %169 = vmatpush2.xpose.msra.mxu0 0.0
    %170 = vmatprep.subr.mxu0 0.0
    %171 = vmatpush2.xpose.msra.mxu0 0.0
    %172 = vmatprep.subr.mxu0 0.0
    %173 = vmatpush2.xpose.msra.mxu0 0.0
    %174 = vmatprep.subr.mxu0 0.0
    %175 = vmatpush2.xpose.msra.mxu0 0.0
    %176 = vmatprep.subr.mxu0 0.0
    %177 = vmatpush2.xpose.msra.mxu0 0.0
    %178 = vmatprep.subr.mxu0 0.0
    %179 = vmatpush2.xpose.msra.mxu0 0.0
    %180 = vmatprep.subr.mxu0 0.0
    %181 = vmatpush2.xpose.msra.mxu0 0.0
    %182 = vmatprep.subr.mxu0 0.0
    %183 = vmatpush2.xpose.msra.mxu0 0.0
    %184 = vmatprep.subr.mxu0 0.0
    %185 = vmatpush2.xpose.msra.mxu0 0.0
    %186 = vmatprep.subr.mxu0 0.0
    %187 = vmatpush2.xpose.msra.mxu0 0.0
    %188 = vmatprep.subr.mxu0 0.0
    %189 = vmatpush2.xpose.msra.mxu0 0.0
    %190 = vmatprep.subr.mxu0 0.0
    %191 = vmatpush2.xpose.msra.mxu0 0.0
    %192 = vmatprep.subr.mxu0 0.0
    %193 = vmatpush2.xpose.msra.mxu0 0.0
    %194 = vmatprep.subr.mxu0 0.0
    %195 = vmatpush2.xpose.msra.mxu0 0.0
    %196 = vmatprep.subr.mxu0 0.0
    %197 = vmatpush2.xpose.msra.mxu0 0.0
    %198 = vmatprep.subr.mxu0 0.0
    %199 = vmatpush2.xpose.msra.mxu0 0.0
    %200 = vmatprep.mubr.f32.mxu0 0.0
    %201 = vmatmul.mubr.f32.gmra.mxu0 %v134
    %v202 = vpop.f32.mrf.mxu0
    %v203 = vadd.f32 0.0, %v202
    %v204 = vpop.f32.mrf.mxu0
    %205 = vdwg.mxu0
    %vm206 = vcmask 64512
    %v207 = vsel %vm206, %v203, -inf
    %v208 = vrot.slane %v207, 4
    %v209 = vmax.f32 %v207, %v208
    %v210 = vrot.slane %v209, 2
    %v211 = vmax.f32 %v209, %v210
    %v212 = vrot.slane %v211, 1
    %v213 = vmax.f32 %v211, %v212
    %v214 = vrcp.pop %v213
    %v215 = vmul.f32 %v203, %v214
    %216 = vst.msk [vmem:[#allocation2] sm:$0xff] %vm206, %v215
    // Predicated region
    $region14: #{tpu_custom_call.1} parent=1 // pred_check
      _
    $region15: #{tpu_custom_call.1} parent=1 // pred_check_branch
      %218 = sbr.rel (0) target = $region17
    $region16: #{tpu_custom_call.1} parent=1 // pred_region
      %s220 = ssub.s32 128, 128
      %221 = vsyncadd [#allocation3], %s220
      %s223 = sshll.u32 [#allocation2], 4
      %s224 = int_to_ptr.vmem [resolvable:$true] %s223
      %226 = dma.vmem_to_hbm [thread:$0]  %s224, 128, %s3, [#allocation3]
    $region17: #{tpu_custom_call.1} parent=1 // pred_fallthru
      _
    // Predicated region
    $region18: #{tpu_custom_call.1} parent=1 // pred_check
      _
    $region19: #{tpu_custom_call.1} parent=1 // pred_check_branch
      %228 = sbr.rel (0) target = $region21
    $region20: #{tpu_custom_call.1} parent=1 // pred_region
      %229 = dma.done [#allocation3], 128
    $region21: #{tpu_custom_call.1} parent=1 // pred_fallthru
      _
    %230 = vsyncpa [#allocation3], 1

</llo_original>
